<compile_context>
chip_gen: v6e
topology: v6e:2x2x1
jax: 0.10.0
libtpu: 0.0.40
codegen_flags: <defaults>
</compile_context>

<pallas_src>
import functools
import math

import jax
import jax.numpy as jnp
from jax.experimental import pallas as pl
from jax.experimental.pallas import tpu as pltpu


_LANE = 128
_TM_CAP = 8192     # rows per block; diminishing returns past a few MiB/block
_TK_CAP = 2048     # contraction elements resident per block before K-tiling


def _round_up(v, m):
    return (v + m - 1) // m * m


def _sublane(dtype):
    # f32 -> 8, bf16 -> 16, int8/fp8 -> 32
    itemsize = jnp.dtype(dtype).itemsize
    return max(8, 32 // max(itemsize, 1))


@functools.lru_cache(maxsize=None)
def _vmem_capacity_bytes():
    """Physical VMEM of the local chip; conservative (v7x) fallback."""
    try:
        cap = getattr(pltpu.get_tpu_info(), "vmem_capacity_bytes", None)
        if cap:
            return int(cap)
    except Exception:
        pass
    return 64 * 1024 * 1024


@functools.lru_cache(maxsize=None)
def _num_tensorcores():
    """2 for parts whose 'parallel' grid axis shards across TensorCores."""
    try:
        kind = jax.devices()[0].device_kind.lower()
    except Exception:
        return 1
    # Single-TC parts first (v5e / v6e and their 'lite' names).
    if "lite" in kind or "v5e" in kind or "v6" in kind:
        return 1
    # v4 / v5p megacore and v7x expose two TensorCores.
    if "v4" in kind or "v5p" in kind or "7" in kind:
        return 2
    return 1


def _select_tk(d_model):
    """Contraction tile: whole d_model if small, else a clean 128-multiple divisor."""
    if d_model <= _TK_CAP:
        return d_model
    # Reduction blocks must divide d_model exactly (a partial trailing K block
    # would add garbage into the accumulator).
    for cand in range(_TK_CAP, _LANE - 1, -_LANE):
        if d_model % cand == 0:
            return cand
    return d_model   # no clean divisor: keep the whole K as one block


def _select_tm(m, tk, n_actions, x_dtype, w_dtype, out_dtype, block_budget, num_tc):
    """Largest sublane-aligned row tile whose pipelined blocks fit the VMEM budget."""
    sub = _sublane(x_dtype)
    x_item = jnp.dtype(x_dtype).itemsize
    w_item = jnp.dtype(w_dtype).itemsize
    o_item = jnp.dtype(out_dtype).itemsize
    lanes_n = _round_up(n_actions, _LANE)   # VMEM lane padding of narrow blocks
    lanes_k = _round_up(tk, _LANE)

    # Streaming (per-row) bytes: double-buffered x and out blocks + f32 acc scratch.
    per_row = 2 * lanes_k * x_item + 2 * lanes_n * o_item + lanes_n * 4
    # Resident blocks (weight, bias), still double-buffered by the pipeline.
    fixed = 2 * (_round_up(tk, 8) * lanes_n * w_item + 8 * lanes_n * 4)

    avail = max(block_budget - fixed, per_row * sub)
    tm = max(sub, (avail // per_row) // sub * sub)
    tm = min(tm, _TM_CAP)

    m_rounded = _round_up(m, sub)
    tm = min(tm, m_rounded)
    # Only force >= 2 row blocks when there are 2 TensorCores to shard across.
    if num_tc >= 2 and m_rounded >= 2 * sub:
        tm = min(tm, _round_up(pl.cdiv(m, 2), sub))
    return tm


def _action_head_kernel(x_ref, w_ref, b_ref, o_ref, acc_ref):
    # x_ref: (tm, tk), w_ref: (tk, n_actions), b_ref: (1, n_actions)
    # o_ref: (tm, n_actions), acc_ref: (tm, n_actions) f32 scratch
    k = pl.program_id(1)

    @pl.when(k == 0)
    def _():
        acc_ref[...] = jnp.zeros_like(acc_ref)

    acc_ref[...] += jnp.dot(x_ref[...], w_ref[...],
                            preferred_element_type=jnp.float32)

    @pl.when(k == pl.num_programs(1) - 1)
    def _():
        o_ref[...] = (acc_ref[...] + b_ref[...].astype(jnp.float32)).astype(o_ref.dtype)


@jax.jit
def action_head(x, weight_t, bias):
    """y = x @ weight_t + bias, matching nn.Linear(d_model, n_actions).

    x:        (..., d_model)
    weight_t: (d_model, n_actions)   == PyTorch Linear.weight.T
    bias:     (n_actions,)
    """
    d_model, n_actions = weight_t.shape
    lead_shape = x.shape[:-1]
    m = math.prod(lead_shape)
    out_dtype = x.dtype

    if m == 0:
        return jnp.zeros((*lead_shape, n_actions), out_dtype)

    x2 = x.reshape(m, d_model)
    bias2 = bias.reshape(1, n_actions)

    vmem_cap = _vmem_capacity_bytes()
    block_budget = vmem_cap // 2                      # headroom for pipeline bufs
    vmem_limit = int(min(vmem_cap * 3 // 4, 96 * 1024 * 1024))

    tk = _select_tk(d_model)
    grid_k = pl.cdiv(d_model, tk)                     # exact when tk < d_model
    tm = _select_tm(m, tk, n_actions, x.dtype, weight_t.dtype, out_dtype,
                    block_budget, _num_tensorcores())
    grid_m = pl.cdiv(m, tm)                           # trailing partial M block masked

    x_item = jnp.dtype(x.dtype).itemsize
    w_item = jnp.dtype(weight_t.dtype).itemsize
    o_item = jnp.dtype(out_dtype).itemsize
    cost = pl.CostEstimate(
        flops=2 * m * d_model * n_actions,
        transcendentals=0,
        bytes_accessed=(m * d_model * x_item
                        + grid_m * d_model * n_actions * w_item
                        + n_actions * jnp.dtype(bias.dtype).itemsize
                        + m * n_actions * o_item),
    )

    out = pl.pallas_call(
        _action_head_kernel,
        out_shape=jax.ShapeDtypeStruct((m, n_actions), out_dtype),
        grid_spec=pltpu.PrefetchScalarGridSpec(
            num_scalar_prefetch=0,
            grid=(grid_m, grid_k),                    # reduction axis last
            in_specs=[
                pl.BlockSpec((tm, tk), lambda i, k: (i, k)),
                pl.BlockSpec((tk, n_actions), lambda i, k: (k, 0)),
                pl.BlockSpec((1, n_actions), lambda i, k: (0, 0)),
            ],
            out_specs=pl.BlockSpec((tm, n_actions), lambda i, k: (i, 0)),
            scratch_shapes=[pltpu.VMEM((tm, n_actions), jnp.float32)],
        ),
        compiler_params=pltpu.CompilerParams(
            dimension_semantics=("parallel", "arbitrary"),
            vmem_limit_bytes=vmem_limit,
        ),
        cost_estimate=cost,
    )(x2, weight_t, bias2)

    return out.reshape(*lead_shape, n_actions)


if __name__ == "__main__":
    # Small config consistent with the module: d_model=32, n_actions=8.
    batch, seq, d_model, n_actions = 2, 8, 32, 8

    key = jax.random.PRNGKey(0)
    kx, kw, kb = jax.random.split(key, 3)

    x = jax.random.normal(kx, (batch, seq, d_model), dtype=jnp.float32)
    # Deterministic parameter init (mimics Linear's uniform(-1/sqrt(d), 1/sqrt(d))).
    bound = 1.0 / (d_model ** 0.5)
    weight = jax.random.uniform(kw, (n_actions, d_model), jnp.float32, -bound, bound)
    bias = jax.random.uniform(kb, (n_actions,), jnp.float32, -bound, bound)

    y = action_head(x, weight.T, bias)
    jax.block_until_ready(y)

    # Reference check against plain JAX (same math as torch.nn.Linear).
    y_ref = x @ weight.T + bias
    assert y.shape == (batch, seq, n_actions)
    assert jnp.allclose(y, y_ref, atol=1e-5, rtol=1e-5)

    # Ragged row count to exercise the masked trailing M block (m % tm != 0).
    x_r = jax.random.normal(kx, (3, 5, d_model), dtype=jnp.float32)
    y_r = action_head(x_r, weight.T, bias)
    jax.block_until_ready(y_r)
    assert y_r.shape == (3, 5, n_actions)
    assert jnp.allclose(y_r, x_r @ weight.T + bias, atol=1e-5, rtol=1e-5)

    print("KERNEL_OK")
</pallas_src>

<mosaic_0001>
module attributes {stable_mosaic.version = 11 : i64} {
  func.func @_action_head_kernel(%arg0: i32, %arg1: i32, %arg2: memref<16x32xf32, #tpu.memory_space<vmem>>, %arg3: memref<32x8xf32, #tpu.memory_space<vmem>>, %arg4: memref<1x8xf32, #tpu.memory_space<vmem>>, %arg5: memref<16x8xf32, #tpu.memory_space<vmem>>, %arg6: memref<16x8xf32, #tpu.memory_space<vmem>>) attributes {dimension_semantics = [#tpu.dimension_semantics<parallel>, #tpu.dimension_semantics<arbitrary>], iteration_bounds = array<i64: 1, 1>, scalar_prefetch = 0 : i64, scratch_operands = 1 : i64, tpu.core_type = #tpu.core_type<tc>, window_params = [{transform_indices = @transform_0, window_bounds = array<i64: 16, 32>}, {transform_indices = @transform_1, window_bounds = array<i64: 32, 8>}, {pipeline_mode = #tpu.pipeline_mode<synchronous>, transform_indices = @transform_2, window_bounds = array<i64: 1, 8>}, {transform_indices = @transform_3, window_bounds = array<i64: 16, 8>}]} {
    %c0_i32 = arith.constant 0 : i32
    %0 = arith.cmpi eq, %arg1, %c0_i32 : i32
    %1 = arith.extui %0 : i1 to i32
    %c0_i32_0 = arith.constant 0 : i32
    %2 = arith.cmpi ne, %1, %c0_i32_0 : i32
    scf.if %2 {
      %cst_10 = arith.constant 0.000000e+00 : f32
      %12 = vector.broadcast %cst_10 : f32 to vector<16x8xf32>
      %c0_11 = arith.constant 0 : index
      %c0_12 = arith.constant 0 : index
      %13 = vector.load %arg6[%c0_11, %c0_12] : memref<16x8xf32, #tpu.memory_space<vmem>>, vector<16x8xf32>
      tpu.vector_store %arg6[%c0_11, %c0_12], %12 {strides = array<i32>} : memref<16x8xf32, #tpu.memory_space<vmem>>, vector<16x8xf32>,
    } else {
    }
    %c0 = arith.constant 0 : index
    %c0_1 = arith.constant 0 : index
    %3 = vector.load %arg6[%c0, %c0_1] : memref<16x8xf32, #tpu.memory_space<vmem>>, vector<16x8xf32>
    %c0_2 = arith.constant 0 : index
    %c0_3 = arith.constant 0 : index
    %4 = vector.load %arg2[%c0_2, %c0_3] : memref<16x32xf32, #tpu.memory_space<vmem>>, vector<16x32xf32>
    %c0_4 = arith.constant 0 : index
    %c0_5 = arith.constant 0 : index
    %5 = vector.load %arg3[%c0_4, %c0_5] : memref<32x8xf32, #tpu.memory_space<vmem>>, vector<32x8xf32>
    %cst = arith.constant dense<0.000000e+00> : vector<16x8xf32>
    %6 = tpu.matmul %4, %5, %cst {dimension_numbers = #tpu.dot_dimension_numbers<[1], [0], [0], [1], [0, 0, 1, 1], [], []>} : vector<16x32xf32>, vector<32x8xf32>, vector<16x8xf32> -> vector<16x8xf32>
    %7 = arith.addf %3, %6 : vector<16x8xf32>
    %c0_6 = arith.constant 0 : index
    %c0_7 = arith.constant 0 : index
    %8 = vector.load %arg6[%c0_6, %c0_7] : memref<16x8xf32, #tpu.memory_space<vmem>>, vector<16x8xf32>
    tpu.vector_store %arg6[%c0_6, %c0_7], %7 {strides = array<i32>} : memref<16x8xf32, #tpu.memory_space<vmem>>, vector<16x8xf32>,
    %c0_i32_8 = arith.constant 0 : i32
    %9 = arith.cmpi eq, %arg1, %c0_i32_8 : i32
    %10 = arith.extui %9 : i1 to i32
    %c0_i32_9 = arith.constant 0 : i32
    %11 = arith.cmpi ne, %10, %c0_i32_9 : i32
    scf.if %11 {
      %c0_10 = arith.constant 0 : index
      %c0_11 = arith.constant 0 : index
      %12 = vector.load %arg6[%c0_10, %c0_11] : memref<16x8xf32, #tpu.memory_space<vmem>>, vector<16x8xf32>
      %c0_12 = arith.constant 0 : index
      %c0_13 = arith.constant 0 : index
      %13 = vector.load %arg4[%c0_12, %c0_13] : memref<1x8xf32, #tpu.memory_space<vmem>>, vector<1x8xf32>
      %14 = vector.broadcast %13 : vector<1x8xf32> to vector<16x8xf32>
      %15 = arith.addf %12, %14 : vector<16x8xf32>
      %c0_14 = arith.constant 0 : index
      %c0_15 = arith.constant 0 : index
      %16 = vector.load %arg5[%c0_14, %c0_15] : memref<16x8xf32, #tpu.memory_space<vmem>>, vector<16x8xf32>
      tpu.vector_store %arg5[%c0_14, %c0_15], %15 {strides = array<i32>} : memref<16x8xf32, #tpu.memory_space<vmem>>, vector<16x8xf32>,
    } else {
    }
    return
  }
  func.func @transform_0(%arg0: i32, %arg1: i32) -> (i32, i32) {
    %c0_i32 = arith.constant 0 : i32
    return %arg0, %arg1 : i32, i32
  }
  func.func @transform_1(%arg0: i32, %arg1: i32) -> (i32, i32) {
    %c0_i32 = arith.constant 0 : i32
    %c0_i32_0 = arith.constant 0 : i32
    return %arg1, %c0_i32 : i32, i32
  }
  func.func @transform_2(%arg0: i32, %arg1: i32) -> (i32, i32) {
    %c0_i32 = arith.constant 0 : i32
    %c0_i32_0 = arith.constant 0 : i32
    %c0_i32_1 = arith.constant 0 : i32
    return %c0_i32, %c0_i32_0 : i32, i32
  }
  func.func @transform_3(%arg0: i32, %arg1: i32) -> (i32, i32) {
    %c0_i32 = arith.constant 0 : i32
    %c0_i32_0 = arith.constant 0 : i32
    return %arg0, %c0_i32 : i32, i32
  }
}

</mosaic_0001>

<llo_original>
// kernel: action_head.1
$region0: #{action_head.1}
  #allocation0 [shape = 'u32[]', space=smem, size = 0x4, offset = 0x4, fixed_abs, tag = 'smem constant byte address 0x4 - core index']
  #allocation1 [shape = 'u32[144,128]{1,0:T(1,128)}', space=vmem, size = 0x12000, scoped, tag = 'internal scratch']
  #allocation2 [shape = 'f32[16,8]{1,0:T(8,128)}', space=vmem, size = 0x2000, scoped, tag = 'scratch operand']
  %s0 = inlined_call_operand.vmem [shape: f32[16,32], index: 0, kind: input, shape index: {}]
  %s1 = inlined_call_operand.vmem [shape: f32[32,8], index: 1, kind: input, shape index: {}]
  %s2 = inlined_call_operand.vmem [shape: f32[1,8], index: 2, kind: input, shape index: {}]
  %s3 = inlined_call_operand.hbm [shape: f32[16,8], index: 3, kind: output, shape index: {}]
  %s4 = sld [smem:[#allocation0]]
  $region30: #{action_head.1} parent=0
    _
  %s6 = ssub.s32 1, %s4
  %s7 = scalar_select 0, %s6, %s4
  $region1: #{action_head.1} parent=0
    #allocation3 [shape = 'u8[8192]{0}', space=vmem, size = 0x2000, scoped, tag = 'output window, operand 0, single buffered']
    #allocation4 [shape = 's32[1]{0}', space=sflag, size = 0x4, scoped, tag = 'scoped memory for action_head.1']
    %8 = vsyncpa [#allocation4], 0
    // Predicated region
    $region2: #{action_head.1} parent=1 // pred_check
      _
    $region3: #{action_head.1} parent=1 // pred_check_branch
      %10 = sbr.rel (0) target = $region5
    $region4: #{action_head.1} parent=1 // pred_region
      _
    $region5: #{action_head.1} parent=1 // pred_fallthru
      _
    // Predicated region
    $region6: #{action_head.1} parent=1 // pred_check
      _
    $region7: #{action_head.1} parent=1 // pred_check_branch
      %12 = sbr.rel (0) target = $region9
    $region8: #{action_head.1} parent=1 // pred_region
      _
    $region9: #{action_head.1} parent=1 // pred_fallthru
      _
    // Predicated region
    $region10: #{action_head.1} parent=1 // pred_check
      _
    $region11: #{action_head.1} parent=1 // pred_check_branch
      %14 = sbr.rel (0) target = $region13
    $region12: #{action_head.1} parent=1 // pred_region
      _
    $region13: #{action_head.1} parent=1 // pred_fallthru
      _
    %p15 = scmp.eq.s32.totalorder 0, 0
    // Predicated region
    $region14: #{action_head.1} parent=1 // pred_check
      %p16 = pneg %p15
    $region15: #{action_head.1} parent=1 // pred_check_branch
      %18 = sbr.rel (%p16) target = $region17
    $region16: #{action_head.1} parent=1 // pred_region
      %vm19 = vcmask 64512
      %20 = vst.msk [vmem:[#allocation2] sm:$0xff] %vm19, 0.0
      %21 = vst.msk [vmem:[#allocation2 + $0x8] sm:$0xff] %vm19, 0.0
    $region17: #{action_head.1} parent=1 // pred_fallthru
      _
    %v22 = vld [vmem:[#allocation2] sm:$0xff]
    %v23 = vld [vmem:[#allocation2 + $0x8] sm:$0xff]
    %v24 = vld [vmem:[%s0] sm:$0xff]
    %v25 = vld [vmem:[%s0 + $0x8] sm:$0xff]
    %v26 = vld [vmem:[%s1] sm:$0xff]
    %v27 = vld [vmem:[%s1 + $0x8] sm:$0xff]
    %v28 = vld [vmem:[%s1 + $0x10] sm:$0xff]
    %v29 = vld [vmem:[%s1 + $0x18] sm:$0xff]
    %vm30 = vcmask 261120
    %v32 = vsel %vm30, %v24, 0
    %v35 = vsel %vm30, %v25, 0
    %37 = vmatprep.subr.mxu0 0.0
    %38 = vmatpush1.msra.mxu0 0.0
    %39 = vmatprep.subr.mxu0 0.0
    %40 = vmatpush1.msra.mxu0 0.0
    %41 = vmatprep.subr.mxu0 0.0
    %42 = vmatpush1.msra.mxu0 0.0
    %43 = vmatprep.subr.mxu0 0.0
    %44 = vmatpush1.msra.mxu0 0.0
    %45 = vmatprep.subr.mxu0 0.0
    %46 = vmatpush1.msra.mxu0 0.0
    %47 = vmatprep.subr.mxu0 0.0
    %48 = vmatpush1.msra.mxu0 0.0
    %49 = vmatprep.subr.mxu0 0.0
    %50 = vmatpush1.msra.mxu0 0.0
    %51 = vmatprep.subr.mxu0 0.0
    %52 = vmatpush1.msra.mxu0 0.0
    %53 = vmatprep.subr.mxu0 0.0
    %54 = vmatpush1.msra.mxu0 0.0
    %55 = vmatprep.subr.mxu0 0.0
    %56 = vmatpush1.msra.mxu0 0.0
    %57 = vmatprep.subr.mxu0 0.0
    %58 = vmatpush1.msra.mxu0 0.0
    %59 = vmatprep.subr.mxu0 0.0
    %60 = vmatpush1.msra.mxu0 0.0
    %61 = vmatprep.subr.mxu0 0.0
    %62 = vmatpush1.msra.mxu0 %v29
    %63 = vmatprep.subr.mxu0 0.0
    %64 = vmatpush1.msra.mxu0 %v28
    %65 = vmatprep.subr.mxu0 0.0
    %66 = vmatpush1.msra.mxu0 %v27
    %67 = vmatprep.subr.mxu0 0.0
    %68 = vmatpush1.msra.mxu0 %v26
    %69 = vmatprep.subr.mxu0 0.0
    %70 = vmatpush2.msra.mxu0 0.0
    %71 = vmatprep.subr.mxu0 0.0
    %72 = vmatpush2.msra.mxu0 0.0
    %73 = vmatprep.subr.mxu0 0.0
    %74 = vmatpush2.msra.mxu0 0.0
    %75 = vmatprep.subr.mxu0 0.0
    %76 = vmatpush2.msra.mxu0 0.0
    %77 = vmatprep.subr.mxu0 0.0
    %78 = vmatpush2.msra.mxu0 0.0
    %79 = vmatprep.subr.mxu0 0.0
    %80 = vmatpush2.msra.mxu0 0.0
    %81 = vmatprep.subr.mxu0 0.0
    %82 = vmatpush2.msra.mxu0 0.0
    %83 = vmatprep.subr.mxu0 0.0
    %84 = vmatpush2.msra.mxu0 0.0
    %85 = vmatprep.subr.mxu0 0.0
    %86 = vmatpush2.msra.mxu0 0.0
    %87 = vmatprep.subr.mxu0 0.0
    %88 = vmatpush2.msra.mxu0 0.0
    %89 = vmatprep.subr.mxu0 0.0
    %90 = vmatpush2.msra.mxu0 0.0
    %91 = vmatprep.subr.mxu0 0.0
    %92 = vmatpush2.msra.mxu0 0.0
    %93 = vmatprep.subr.mxu0 0.0
    %94 = vmatpush2.msra.mxu0 0.0
    %95 = vmatprep.subr.mxu0 0.0
    %96 = vmatpush2.msra.mxu0 0.0
    %97 = vmatprep.subr.mxu0 0.0
    %98 = vmatpush2.msra.mxu0 0.0
    %99 = vmatprep.subr.mxu0 0.0
    %100 = vmatpush2.msra.mxu0 0.0
    %101 = vmatprep.mubr.f32.mxu0 0.0
    %102 = vmatmul.mubr.f32.gmra.mxu0 %v32
    %v103 = vpop.f32.mrf.mxu0
    %v104 = vadd.f32 0.0, %v103
    %v105 = vpop.f32.mrf.mxu0
    %106 = vmatprep.mubr.f32.mxu0 0.0
    %107 = vmatmul.mubr.f32.gmra.mxu0 %v35
    %v108 = vpop.f32.mrf.mxu0
    %v109 = vadd.f32 0.0, %v108
    %v110 = vpop.f32.mrf.mxu0
    %111 = vdwg.mxu0
    %v112 = vadd.f32 %v22, %v104
    %v113 = vadd.f32 %v23, %v109
    %vm114 = vcmask 64512
    %115 = vst.msk [vmem:[#allocation2] sm:$0xff] %vm114, %v112
    %116 = vst.msk [vmem:[#allocation2 + $0x8] sm:$0xff] %vm114, %v113
    // Predicated region
    $region18: #{action_head.1} parent=1 // pred_check
      %p117 = pneg %p15
    $region19: #{action_head.1} parent=1 // pred_check_branch
      %119 = sbr.rel (%p117) target = $region21
    $region20: #{action_head.1} parent=1 // pred_region
      %v120 = vld [vmem:[#allocation2] sm:$0xff]
      %v121 = vld [vmem:[#allocation2 + $0x8] sm:$0xff]
      %v122 = vld [vmem:[%s2] sm:$0x1]
      %v124 = vlaneseq
      %v125 = vshrl.u32 %v124, 7
      %v126 = vsub.s32 0, %v125
      %v127 = vrot.slane %v122, %v126
      %v129 = vadd.f32 %v120, %v127
      %v130 = vadd.f32 %v121, %v127
      %131 = vst.msk [vmem:[#allocation3] sm:$0xff] %vm114, %v129
      %132 = vst.msk [vmem:[#allocation3 + $0x8] sm:$0xff] %vm114, %v130
    $region21: #{action_head.1} parent=1 // pred_fallthru
      _
    // Predicated region
    $region22: #{action_head.1} parent=1 // pred_check
      _
    $region23: #{action_head.1} parent=1 // pred_check_branch
      %134 = sbr.rel (0) target = $region25
    $region24: #{action_head.1} parent=1 // pred_region
      %s136 = ssub.s32 256, 256
      %137 = vsyncadd [#allocation4], %s136
      %s138 = sshll.u32 [#allocation3], 4
      %s139 = int_to_ptr.vmem [resolvable:$true] %s138
      %144 = dma.vmem_to_hbm [thread:$0]  %s139, 256, %s3, [#allocation4], 128, 128, 8
    $region25: #{action_head.1} parent=1 // pred_fallthru
      _
    // Predicated region
    $region26: #{action_head.1} parent=1 // pred_check
      _
    $region27: #{action_head.1} parent=1 // pred_check_branch
      %146 = sbr.rel (0) target = $region29
    $region28: #{action_head.1} parent=1 // pred_region
      %147 = dma.done [#allocation4], 256
    $region29: #{action_head.1} parent=1 // pred_fallthru
      _
    %148 = vsyncpa [#allocation4], 1

</llo_original>
